<compile_context>
chip_gen: v7x
topology: tpu7x:2x2x1
jax: 0.10.0
libtpu: 0.0.40
codegen_flags: <defaults>
</compile_context>

<pallas_src>
import functools

import jax
import jax.numpy as jnp
from jax.experimental import pallas as pl
from jax.experimental.pallas import tpu as pltpu


def attention_kernel(x_ref, wq_ref, wk_ref, wv_ref, wout_ref, gamma_ref, beta_ref,
                     o_ref, *, heads, dim_head, seq_len, exp_dtype):
    rows, d = x_ref.shape            # rows = block_b * seq_len
    n = seq_len
    dh = dim_head
    bt = rows // n                   # batch elements handled in this grid step

    # ---- LayerNorm (f32, biased variance, eps=1e-5, matching torch) ----
    x = x_ref[...].astype(jnp.float32)                         # (rows, d)
    gamma = gamma_ref[...]                                     # (1, d) f32
    beta = beta_ref[...]
    mean = jnp.mean(x, axis=-1, keepdims=True)
    var = jnp.mean((x - mean) ** 2, axis=-1, keepdims=True)
    xn = ((x - mean) * jax.lax.rsqrt(var + 1e-5) * gamma + beta).astype(jnp.bfloat16)

    # ---- three lane-aligned projections (scale pre-folded into W_q) ----
    q = jnp.dot(xn, wq_ref[...], preferred_element_type=jnp.float32)   # (rows, inner)
    k = jnp.dot(xn, wk_ref[...], preferred_element_type=jnp.float32)
    v = jnp.dot(xn, wv_ref[...], preferred_element_type=jnp.float32)

    # ---- (rows=(b,n), cols=(h,dh)) -> head-batched (heads*bt, n, dh).
    # The interleaved->batched relayout is inherent to the fused column layout;
    # it is expressed with lane slices + a leading-axis concat (compile-safe)
    # and feeds a single batched contraction below.
    def split_heads(t):
        parts = [t[:, h * dh:(h + 1) * dh].reshape(bt, n, dh).astype(jnp.bfloat16)
                 for h in range(heads)]
        return jnp.concatenate(parts, axis=0)                  # (heads*bt, n, dh)

    qh, kh, vh = split_heads(q), split_heads(k), split_heads(v)

    # ---- one batched QK^T, one softmax, one batched AV across ALL heads ----
    # TODO(synk): for large N, tile the KV axis (online softmax) instead of
    # materializing the full (heads*bt, N, N) score tensor.
    s = jnp.einsum("znd,zmd->znm", qh, kh, preferred_element_type=jnp.float32)
    s = s - jnp.max(s, axis=-1, keepdims=True)
    p = jnp.exp(s.astype(exp_dtype))                           # bf16 on v6e/v7x, f32 on v5e
    denom = jnp.sum(p, axis=-1, keepdims=True, dtype=jnp.float32)
    inv = pl.reciprocal(denom, approx=True)                    # EUP; inference-grade accuracy
    attn = (p * inv.astype(p.dtype)).astype(jnp.bfloat16)
    oh = jnp.einsum("znm,zmd->znd", attn, vh, preferred_element_type=jnp.float32)

    # ---- merge heads into a (rows, inner) slab; ONE K=inner output matmul ----
    o_slab = jnp.concatenate(
        [oh[h * bt:(h + 1) * bt].reshape(rows, dh).astype(jnp.bfloat16)
         for h in range(heads)],
        axis=-1)                                               # (rows, inner)
    out = jnp.dot(o_slab, wout_ref[...], preferred_element_type=jnp.float32)
    o_ref[...] = out.astype(o_ref.dtype)


def _vmem_limit_bytes():
    """~80% of the chip's physical VMEM (v7x: 64 MiB, v5e/v6e: 128 MiB)."""
    cap = 128 * 1024 * 1024
    try:
        info = pltpu.get_tpu_info()
        cap = int(getattr(info, "vmem_capacity_bytes", cap) or cap)
    except Exception:
        pass
    return max(32 * 1024 * 1024, int(cap * 0.8))


def _softmax_exp_dtype():
    """bf16 exp on v6e/v7x (bf16 VPU/EUP); f32 on v5e and older parts."""
    try:
        kind = jax.devices()[0].device_kind.lower()
    except Exception:
        return jnp.float32
    if ("v6" in kind) or ("v7" in kind) or ("6e" in kind) or ("7x" in kind):
        return jnp.bfloat16
    return jnp.float32


def _pick_block_b(batch, n, d, heads, dim_head, vmem_limit_bytes):
    """Largest divisor of `batch` that fits the VMEM budget and keeps >=2 grid steps."""
    inner = heads * dim_head
    # Rough f32 working set per batch element per grid step: score/prob tiles,
    # head-batched q/k/v/o copies, x/xn/out slabs, plus double-buffered I/O blocks.
    per_b = 4 * (heads * n * n + 4 * n * inner + 4 * n * d) + 4 * (2 * 2 * n * d)
    budget = max(vmem_limit_bytes // 2, 1)      # leave half for weights + compiler scratch
    max_bb = max(1, budget // per_b)
    if batch >= 2:                              # >=2 grid steps so both v7x TCs get work
        max_bb = min(max_bb, batch // 2)
    max_bb = min(max_bb, batch)
    for bb in range(max_bb, 0, -1):
        if batch % bb == 0:
            return bb
    return 1


def _replicated_spec(shape):
    """BlockSpec for a grid-invariant operand; single-buffered when supported."""
    ndim = len(shape)
    index_map = lambda b: (0,) * ndim
    try:
        return pl.BlockSpec(shape, index_map, pipeline_mode=pl.Buffered(1))
    except Exception:  # older jax without pipeline_mode / pl.Buffered
        return pl.BlockSpec(shape, index_map)


def attention_forward(x, wqkv, wout, gamma, beta, *, heads, dim_head, block_b=None):
    B, N, D = x.shape
    inner = heads * dim_head
    assert wqkv.shape == (D, 3 * inner)
    assert wout.shape == (inner, D)

    scale = dim_head ** (-0.5)
    # Split the fused QKV weight into three lane-aligned operands and fold the
    # softmax scale into W_q, so the kernel never slices the projection result
    # at non-128-lane offsets and never multiplies by scale at runtime.
    wq = (wqkv[:, :inner].astype(jnp.float32) * scale).astype(jnp.bfloat16)
    wk = wqkv[:, inner:2 * inner].astype(jnp.bfloat16)
    wv = wqkv[:, 2 * inner:].astype(jnp.bfloat16)
    wout_b = wout.astype(jnp.bfloat16)
    gamma2 = jnp.reshape(gamma, (1, D)).astype(jnp.float32)
    beta2 = jnp.reshape(beta, (1, D)).astype(jnp.float32)

    vmem_limit = _vmem_limit_bytes()
    if block_b is None:
        block_b = _pick_block_b(B, N, D, heads, dim_head, vmem_limit)
    assert B % block_b == 0

    exp_dtype = _softmax_exp_dtype()

    # Flatten (B, N) so the kernel works on plain 2-D (block_b*N, D) blocks
    # (no per-step I/O reshapes for LayerNorm / projections / out-proj).
    x_rows = x.reshape(B * N, D)

    kernel = functools.partial(attention_kernel, heads=heads, dim_head=dim_head,
                               seq_len=N, exp_dtype=exp_dtype)
    out_rows = pl.pallas_call(
        kernel,
        out_shape=jax.ShapeDtypeStruct((B * N, D), x.dtype),
        grid=(B // block_b,),
        in_specs=[
            pl.BlockSpec((block_b * N, D), lambda b: (b, 0)),   # x rows
            _replicated_spec((D, inner)),                       # W_q (scale folded)
            _replicated_spec((D, inner)),                       # W_k
            _replicated_spec((D, inner)),                       # W_v
            _replicated_spec((inner, D)),                       # W_out
            _replicated_spec((1, D)),                           # LN gamma
            _replicated_spec((1, D)),                           # LN beta
        ],
        out_specs=pl.BlockSpec((block_b * N, D), lambda b: (b, 0)),
        compiler_params=pltpu.CompilerParams(
            dimension_semantics=("parallel",),
            vmem_limit_bytes=vmem_limit,
        ),
    )(x_rows, wq, wk, wv, wout_b, gamma2, beta2)
    return out_rows.reshape(B, N, D)


def attention_reference(x, wqkv, wout, gamma, beta, *, heads, dim_head):
    """Pure-JAX f32 reference mirroring the PyTorch forward."""
    B, N, D = x.shape
    inner = heads * dim_head
    xf = x.astype(jnp.float32)
    mean = jnp.mean(xf, axis=-1, keepdims=True)
    var = jnp.mean((xf - mean) ** 2, axis=-1, keepdims=True)
    xn = (xf - mean) / jnp.sqrt(var + 1e-5) * gamma + beta
    qkv = xn @ wqkv.astype(jnp.float32)
    q, k, v = jnp.split(qkv, 3, axis=-1)

    def to_heads(t):
        return t.reshape(B, N, heads, dim_head).transpose(0, 2, 1, 3)

    q, k, v = map(to_heads, (q, k, v))
    dots = jnp.einsum("bhnd,bhmd->bhnm", q, k) * (dim_head ** -0.5)
    attn = jax.nn.softmax(dots, axis=-1)
    out = jnp.einsum("bhnm,bhmd->bhnd", attn, v)
    out = out.transpose(0, 2, 1, 3).reshape(B, N, inner)
    return (out @ wout.astype(jnp.float32)).astype(x.dtype)


if __name__ == "__main__":
    # Small shapes consistent with the module: dim=32, heads=4, dim_head=16.
    B, N, D = 2, 8, 32
    HEADS, DIM_HEAD = 4, 16
    INNER = HEADS * DIM_HEAD

    key = jax.random.PRNGKey(0)
    kx, kq, ko, kg, kb = jax.random.split(key, 5)

    x = jax.random.normal(kx, (B, N, D), dtype=jnp.float32)
    # nn.Linear(dim, 3*inner, bias=False): stored pre-transposed as (dim, 3*inner).
    wqkv = jax.random.normal(kq, (D, 3 * INNER), dtype=jnp.float32) * 0.05
    # nn.Linear(inner, dim, bias=False): stored pre-transposed as (inner, dim).
    wout = jax.random.normal(ko, (INNER, D), dtype=jnp.float32) * 0.05
    # nn.LayerNorm(dim) params (perturbed from ones/zeros for a real test).
    gamma = (jnp.ones((1, D), jnp.float32)
             + 0.1 * jax.random.normal(kg, (1, D), dtype=jnp.float32))
    beta = 0.1 * jax.random.normal(kb, (1, D), dtype=jnp.float32)

    out = attention_forward(x, wqkv, wout, gamma, beta, heads=HEADS, dim_head=DIM_HEAD)
    out = jax.block_until_ready(out)

    ref = attention_reference(x, wqkv, wout, gamma, beta, heads=HEADS, dim_head=DIM_HEAD)
    assert out.shape == (B, N, D)
    # bf16 MXU inputs, bf16 exp on v6e/v7x, approx reciprocal => loose tolerance.
    max_err = float(jnp.max(jnp.abs(out - ref)))
    assert jnp.allclose(out, ref, atol=1e-2, rtol=1e-2), (
        f"mismatch vs reference; max abs err = {max_err}")

    print("KERNEL_OK")
</pallas_src>

<mosaic_0001>
module attributes {stable_mosaic.version = 11 : i64} {
  func.func @attention_kernel(%arg0: i32, %arg1: memref<8x32xf32, #tpu.memory_space<vmem>>, %arg2: memref<32x64xbf16, #tpu.memory_space<vmem>>, %arg3: memref<32x64xbf16, #tpu.memory_space<vmem>>, %arg4: memref<32x64xbf16, #tpu.memory_space<vmem>>, %arg5: memref<64x32xbf16, #tpu.memory_space<vmem>>, %arg6: memref<1x32xf32, #tpu.memory_space<vmem>>, %arg7: memref<1x32xf32, #tpu.memory_space<vmem>>, %arg8: memref<8x32xf32, #tpu.memory_space<vmem>>) attributes {dimension_semantics = [#tpu.dimension_semantics<parallel>], iteration_bounds = array<i64: 2>, scalar_prefetch = 0 : i64, scratch_operands = 0 : i64, tpu.core_type = #tpu.core_type<tc>, window_params = [{transform_indices = @transform_0, window_bounds = array<i64: 8, 32>}, {pipeline_mode = #tpu.pipeline_mode<synchronous>, transform_indices = @transform_1, window_bounds = array<i64: 32, 64>}, {pipeline_mode = #tpu.pipeline_mode<synchronous>, transform_indices = @transform_2, window_bounds = array<i64: 32, 64>}, {pipeline_mode = #tpu.pipeline_mode<synchronous>, transform_indices = @transform_3, window_bounds = array<i64: 32, 64>}, {pipeline_mode = #tpu.pipeline_mode<synchronous>, transform_indices = @transform_4, window_bounds = array<i64: 64, 32>}, {pipeline_mode = #tpu.pipeline_mode<synchronous>, transform_indices = @transform_5, window_bounds = array<i64: 1, 32>}, {pipeline_mode = #tpu.pipeline_mode<synchronous>, transform_indices = @transform_6, window_bounds = array<i64: 1, 32>}, {transform_indices = @transform_7, window_bounds = array<i64: 8, 32>}]} {
    %c0 = arith.constant 0 : index
    %c0_0 = arith.constant 0 : index
    %0 = vector.load %arg1[%c0, %c0_0] : memref<8x32xf32, #tpu.memory_space<vmem>>, vector<8x32xf32>
    %c0_1 = arith.constant 0 : index
    %c0_2 = arith.constant 0 : index
    %1 = vector.load %arg6[%c0_1, %c0_2] : memref<1x32xf32, #tpu.memory_space<vmem>>, vector<1x32xf32>
    %c0_3 = arith.constant 0 : index
    %c0_4 = arith.constant 0 : index
    %2 = vector.load %arg7[%c0_3, %c0_4] : memref<1x32xf32, #tpu.memory_space<vmem>>, vector<1x32xf32>
    %cst = arith.constant dense<0.000000e+00> : vector<8xf32>
    %3 = vector.multi_reduction <add>, %0, %cst [1] : vector<8x32xf32> to vector<8xf32>
    %4 = vector.shape_cast %3 : vector<8xf32> to vector<8x1xf32>
    %cst_5 = arith.constant 3.200000e+01 : f32
    %5 = vector.broadcast %cst_5 : f32 to vector<8x1xf32>
    %6 = arith.divf %4, %5 : vector<8x1xf32>
    %7 = vector.broadcast %6 : vector<8x1xf32> to vector<8x32xf32>
    %8 = arith.subf %0, %7 : vector<8x32xf32>
    %9 = arith.mulf %8, %8 : vector<8x32xf32>
    %cst_6 = arith.constant dense<0.000000e+00> : vector<8xf32>
    %10 = vector.multi_reduction <add>, %9, %cst_6 [1] : vector<8x32xf32> to vector<8xf32>
    %11 = vector.shape_cast %10 : vector<8xf32> to vector<8x1xf32>
    %cst_7 = arith.constant 3.200000e+01 : f32
    %12 = vector.broadcast %cst_7 : f32 to vector<8x1xf32>
    %13 = arith.divf %11, %12 : vector<8x1xf32>
    %14 = vector.broadcast %6 : vector<8x1xf32> to vector<8x32xf32>
    %15 = arith.subf %0, %14 : vector<8x32xf32>
    %cst_8 = arith.constant 9.99999974E-6 : f32
    %16 = vector.broadcast %cst_8 : f32 to vector<8x1xf32>
    %17 = arith.addf %13, %16 : vector<8x1xf32>
    %18 = math.rsqrt %17 : vector<8x1xf32>
    %19 = vector.broadcast %18 : vector<8x1xf32> to vector<8x32xf32>
    %20 = arith.mulf %15, %19 : vector<8x32xf32>
    %21 = vector.broadcast %1 : vector<1x32xf32> to vector<8x32xf32>
    %22 = arith.mulf %20, %21 : vector<8x32xf32>
    %23 = vector.broadcast %2 : vector<1x32xf32> to vector<8x32xf32>
    %24 = arith.addf %22, %23 : vector<8x32xf32>
    %25 = arith.truncf %24 : vector<8x32xf32> to vector<8x32xbf16>
    %c0_9 = arith.constant 0 : index
    %c0_10 = arith.constant 0 : index
    %26 = vector.load %arg2[%c0_9, %c0_10] : memref<32x64xbf16, #tpu.memory_space<vmem>>, vector<32x64xbf16>
    %cst_11 = arith.constant dense<0.000000e+00> : vector<8x64xf32>
    %27 = tpu.matmul %25, %26, %cst_11 {dimension_numbers = #tpu.dot_dimension_numbers<[1], [0], [0], [1], [0, 0, 1, 1], [], []>} : vector<8x32xbf16>, vector<32x64xbf16>, vector<8x64xf32> -> vector<8x64xf32>
    %c0_12 = arith.constant 0 : index
    %c0_13 = arith.constant 0 : index
    %28 = vector.load %arg3[%c0_12, %c0_13] : memref<32x64xbf16, #tpu.memory_space<vmem>>, vector<32x64xbf16>
    %cst_14 = arith.constant dense<0.000000e+00> : vector<8x64xf32>
    %29 = tpu.matmul %25, %28, %cst_14 {dimension_numbers = #tpu.dot_dimension_numbers<[1], [0], [0], [1], [0, 0, 1, 1], [], []>} : vector<8x32xbf16>, vector<32x64xbf16>, vector<8x64xf32> -> vector<8x64xf32>
    %c0_15 = arith.constant 0 : index
    %c0_16 = arith.constant 0 : index
    %30 = vector.load %arg4[%c0_15, %c0_16] : memref<32x64xbf16, #tpu.memory_space<vmem>>, vector<32x64xbf16>
    %cst_17 = arith.constant dense<0.000000e+00> : vector<8x64xf32>
    %31 = tpu.matmul %25, %30, %cst_17 {dimension_numbers = #tpu.dot_dimension_numbers<[1], [0], [0], [1], [0, 0, 1, 1], [], []>} : vector<8x32xbf16>, vector<32x64xbf16>, vector<8x64xf32> -> vector<8x64xf32>
    %32 = vector.extract_strided_slice %27 {offsets = [0, 0], sizes = [8, 16], strides = [1, 1]} : vector<8x64xf32> to vector<8x16xf32>
    %33 = vector.shape_cast %32 : vector<8x16xf32> to vector<1x8x16xf32>
    %34 = arith.truncf %33 : vector<1x8x16xf32> to vector<1x8x16xbf16>
    %35 = vector.extract_strided_slice %27 {offsets = [0, 16], sizes = [8, 16], strides = [1, 1]} : vector<8x64xf32> to vector<8x16xf32>
    %36 = vector.shape_cast %35 : vector<8x16xf32> to vector<1x8x16xf32>
    %37 = arith.truncf %36 : vector<1x8x16xf32> to vector<1x8x16xbf16>
    %38 = vector.extract_strided_slice %27 {offsets = [0, 32], sizes = [8, 16], strides = [1, 1]} : vector<8x64xf32> to vector<8x16xf32>
    %39 = vector.shape_cast %38 : vector<8x16xf32> to vector<1x8x16xf32>
    %40 = arith.truncf %39 : vector<1x8x16xf32> to vector<1x8x16xbf16>
    %41 = vector.extract_strided_slice %27 {offsets = [0, 48], sizes = [8, 16], strides = [1, 1]} : vector<8x64xf32> to vector<8x16xf32>
    %42 = vector.shape_cast %41 : vector<8x16xf32> to vector<1x8x16xf32>
    %43 = arith.truncf %42 : vector<1x8x16xf32> to vector<1x8x16xbf16>
    %44 = tpu.concatenate %34, %37, %40, %43 in 0 : vector<1x8x16xbf16>, vector<1x8x16xbf16>, vector<1x8x16xbf16>, vector<1x8x16xbf16> -> vector<4x8x16xbf16>
    %45 = vector.extract_strided_slice %29 {offsets = [0, 0], sizes = [8, 16], strides = [1, 1]} : vector<8x64xf32> to vector<8x16xf32>
    %46 = vector.shape_cast %45 : vector<8x16xf32> to vector<1x8x16xf32>
    %47 = arith.truncf %46 : vector<1x8x16xf32> to vector<1x8x16xbf16>
    %48 = vector.extract_strided_slice %29 {offsets = [0, 16], sizes = [8, 16], strides = [1, 1]} : vector<8x64xf32> to vector<8x16xf32>
    %49 = vector.shape_cast %48 : vector<8x16xf32> to vector<1x8x16xf32>
    %50 = arith.truncf %49 : vector<1x8x16xf32> to vector<1x8x16xbf16>
    %51 = vector.extract_strided_slice %29 {offsets = [0, 32], sizes = [8, 16], strides = [1, 1]} : vector<8x64xf32> to vector<8x16xf32>
    %52 = vector.shape_cast %51 : vector<8x16xf32> to vector<1x8x16xf32>
    %53 = arith.truncf %52 : vector<1x8x16xf32> to vector<1x8x16xbf16>
    %54 = vector.extract_strided_slice %29 {offsets = [0, 48], sizes = [8, 16], strides = [1, 1]} : vector<8x64xf32> to vector<8x16xf32>
    %55 = vector.shape_cast %54 : vector<8x16xf32> to vector<1x8x16xf32>
    %56 = arith.truncf %55 : vector<1x8x16xf32> to vector<1x8x16xbf16>
    %57 = tpu.concatenate %47, %50, %53, %56 in 0 : vector<1x8x16xbf16>, vector<1x8x16xbf16>, vector<1x8x16xbf16>, vector<1x8x16xbf16> -> vector<4x8x16xbf16>
    %58 = vector.extract_strided_slice %31 {offsets = [0, 0], sizes = [8, 16], strides = [1, 1]} : vector<8x64xf32> to vector<8x16xf32>
    %59 = vector.shape_cast %58 : vector<8x16xf32> to vector<1x8x16xf32>
    %60 = arith.truncf %59 : vector<1x8x16xf32> to vector<1x8x16xbf16>
    %61 = vector.extract_strided_slice %31 {offsets = [0, 16], sizes = [8, 16], strides = [1, 1]} : vector<8x64xf32> to vector<8x16xf32>
    %62 = vector.shape_cast %61 : vector<8x16xf32> to vector<1x8x16xf32>
    %63 = arith.truncf %62 : vector<1x8x16xf32> to vector<1x8x16xbf16>
    %64 = vector.extract_strided_slice %31 {offsets = [0, 32], sizes = [8, 16], strides = [1, 1]} : vector<8x64xf32> to vector<8x16xf32>
    %65 = vector.shape_cast %64 : vector<8x16xf32> to vector<1x8x16xf32>
    %66 = arith.truncf %65 : vector<1x8x16xf32> to vector<1x8x16xbf16>
    %67 = vector.extract_strided_slice %31 {offsets = [0, 48], sizes = [8, 16], strides = [1, 1]} : vector<8x64xf32> to vector<8x16xf32>
    %68 = vector.shape_cast %67 : vector<8x16xf32> to vector<1x8x16xf32>
    %69 = arith.truncf %68 : vector<1x8x16xf32> to vector<1x8x16xbf16>
    %70 = tpu.concatenate %60, %63, %66, %69 in 0 : vector<1x8x16xbf16>, vector<1x8x16xbf16>, vector<1x8x16xbf16>, vector<1x8x16xbf16> -> vector<4x8x16xbf16>
    "tpu.trace_start"() <{level = 10 : i32, message = "znd,zmd->znm"}> : () -> ()
    %cst_18 = arith.constant dense<0.000000e+00> : vector<4x8x8xf32>
    %71 = tpu.matmul %44, %57, %cst_18 {dimension_numbers = #tpu.dot_dimension_numbers<[2], [2], [1], [1], [0, 0, 0, 1, 1, 1], [0], [0]>} : vector<4x8x16xbf16>, vector<4x8x16xbf16>, vector<4x8x8xf32> -> vector<4x8x8xf32>
    "tpu.trace_stop"() : () -> ()
    %cst_19 = arith.constant dense<0xFF800000> : vector<4x8xf32>
    %72 = vector.multi_reduction <maximumf>, %71, %cst_19 [2] : vector<4x8x8xf32> to vector<4x8xf32>
    %73 = vector.shape_cast %72 : vector<4x8xf32> to vector<4x8x1xf32>
    %74 = vector.broadcast %73 : vector<4x8x1xf32> to vector<4x8x8xf32>
    %75 = arith.subf %71, %74 : vector<4x8x8xf32>
    %76 = math.exp %75 : vector<4x8x8xf32>
    %cst_20 = arith.constant dense<0.000000e+00> : vector<4x8xf32>
    %77 = vector.multi_reduction <add>, %76, %cst_20 [2] : vector<4x8x8xf32> to vector<4x8xf32>
    %78 = vector.shape_cast %77 : vector<4x8xf32> to vector<4x8x1xf32>
    %79 = tpu.reciprocal %78 {approx = true} : vector<4x8x1xf32> -> vector<4x8x1xf32>
    %80 = vector.broadcast %79 : vector<4x8x1xf32> to vector<4x8x8xf32>
    %81 = arith.mulf %76, %80 : vector<4x8x8xf32>
    %82 = arith.truncf %81 : vector<4x8x8xf32> to vector<4x8x8xbf16>
    "tpu.trace_start"() <{level = 10 : i32, message = "znm,zmd->znd"}> : () -> ()
    %cst_21 = arith.constant dense<0.000000e+00> : vector<4x8x16xf32>
    %83 = tpu.matmul %82, %70, %cst_21 {dimension_numbers = #tpu.dot_dimension_numbers<[2], [1], [1], [2], [0, 0, 0, 1, 1, 2], [0], [0]>} : vector<4x8x8xbf16>, vector<4x8x16xbf16>, vector<4x8x16xf32> -> vector<4x8x16xf32>
    "tpu.trace_stop"() : () -> ()
    %84 = vector.extract_strided_slice %83 {offsets = [0, 0, 0], sizes = [1, 8, 16], strides = [1, 1, 1]} : vector<4x8x16xf32> to vector<1x8x16xf32>
    %85 = vector.shape_cast %84 : vector<1x8x16xf32> to vector<8x16xf32>
    %86 = arith.truncf %85 : vector<8x16xf32> to vector<8x16xbf16>
    %87 = vector.extract_strided_slice %83 {offsets = [1, 0, 0], sizes = [1, 8, 16], strides = [1, 1, 1]} : vector<4x8x16xf32> to vector<1x8x16xf32>
    %88 = vector.shape_cast %87 : vector<1x8x16xf32> to vector<8x16xf32>
    %89 = arith.truncf %88 : vector<8x16xf32> to vector<8x16xbf16>
    %90 = vector.extract_strided_slice %83 {offsets = [2, 0, 0], sizes = [1, 8, 16], strides = [1, 1, 1]} : vector<4x8x16xf32> to vector<1x8x16xf32>
    %91 = vector.shape_cast %90 : vector<1x8x16xf32> to vector<8x16xf32>
    %92 = arith.truncf %91 : vector<8x16xf32> to vector<8x16xbf16>
    %93 = vector.extract_strided_slice %83 {offsets = [3, 0, 0], sizes = [1, 8, 16], strides = [1, 1, 1]} : vector<4x8x16xf32> to vector<1x8x16xf32>
    %94 = vector.shape_cast %93 : vector<1x8x16xf32> to vector<8x16xf32>
    %95 = arith.truncf %94 : vector<8x16xf32> to vector<8x16xbf16>
    %96 = tpu.concatenate %86, %89, %92, %95 in 1 : vector<8x16xbf16>, vector<8x16xbf16>, vector<8x16xbf16>, vector<8x16xbf16> -> vector<8x64xbf16>
    %c0_22 = arith.constant 0 : index
    %c0_23 = arith.constant 0 : index
    %97 = vector.load %arg5[%c0_22, %c0_23] : memref<64x32xbf16, #tpu.memory_space<vmem>>, vector<64x32xbf16>
    %cst_24 = arith.constant dense<0.000000e+00> : vector<8x32xf32>
    %98 = tpu.matmul %96, %97, %cst_24 {dimension_numbers = #tpu.dot_dimension_numbers<[1], [0], [0], [1], [0, 0, 1, 1], [], []>} : vector<8x64xbf16>, vector<64x32xbf16>, vector<8x32xf32> -> vector<8x32xf32>
    %c0_25 = arith.constant 0 : index
    %c0_26 = arith.constant 0 : index
    %99 = vector.load %arg8[%c0_25, %c0_26] : memref<8x32xf32, #tpu.memory_space<vmem>>, vector<8x32xf32>
    tpu.vector_store %arg8[%c0_25, %c0_26], %98 {strides = array<i32>} : memref<8x32xf32, #tpu.memory_space<vmem>>, vector<8x32xf32>,
    return
  }
  func.func @transform_0(%arg0: i32) -> (i32, i32) {
    %c0_i32 = arith.constant 0 : i32
    %c0_i32_0 = arith.constant 0 : i32
    return %arg0, %c0_i32 : i32, i32
  }
  func.func @transform_1(%arg0: i32) -> (i32, i32) {
    %c0_i32 = arith.constant 0 : i32
    %c0_i32_0 = arith.constant 0 : i32
    %c0_i32_1 = arith.constant 0 : i32
    return %c0_i32, %c0_i32_0 : i32, i32
  }
  func.func @transform_2(%arg0: i32) -> (i32, i32) {
    %c0_i32 = arith.constant 0 : i32
    %c0_i32_0 = arith.constant 0 : i32
    %c0_i32_1 = arith.constant 0 : i32
    return %c0_i32, %c0_i32_0 : i32, i32
  }
  func.func @transform_3(%arg0: i32) -> (i32, i32) {
    %c0_i32 = arith.constant 0 : i32
    %c0_i32_0 = arith.constant 0 : i32
    %c0_i32_1 = arith.constant 0 : i32
    return %c0_i32, %c0_i32_0 : i32, i32
  }
  func.func @transform_4(%arg0: i32) -> (i32, i32) {
    %c0_i32 = arith.constant 0 : i32
    %c0_i32_0 = arith.constant 0 : i32
    %c0_i32_1 = arith.constant 0 : i32
    return %c0_i32, %c0_i32_0 : i32, i32
  }
  func.func @transform_5(%arg0: i32) -> (i32, i32) {
    %c0_i32 = arith.constant 0 : i32
    %c0_i32_0 = arith.constant 0 : i32
    %c0_i32_1 = arith.constant 0 : i32
    return %c0_i32, %c0_i32_0 : i32, i32
  }
  func.func @transform_6(%arg0: i32) -> (i32, i32) {
    %c0_i32 = arith.constant 0 : i32
    %c0_i32_0 = arith.constant 0 : i32
    %c0_i32_1 = arith.constant 0 : i32
    return %c0_i32, %c0_i32_0 : i32, i32
  }
  func.func @transform_7(%arg0: i32) -> (i32, i32) {
    %c0_i32 = arith.constant 0 : i32
    %c0_i32_0 = arith.constant 0 : i32
    return %arg0, %c0_i32 : i32, i32
  }
}

</mosaic_0001>

<llo_original>
// kernel: tpu_custom_call.1
$region0: #{tpu_custom_call.1}
  #allocation0 [shape = 'u32[]', space=smem, size = 0x4, offset = 0x4, fixed_abs, tag = 'smem constant byte address 0x4 - core index']
  #allocation1 [shape = 'u32[144,128]{1,0:T(1,128)}', space=vmem, size = 0x12000, scoped, tag = 'internal scratch']
  %s0 = inlined_call_operand.hbm [shape: f32[16,32], index: 0, kind: input, shape index: {}]
  %s1 = inlined_call_operand.hbm [shape: bf16[32,64], index: 1, kind: input, shape index: {}]
  %s2 = inlined_call_operand.hbm [shape: bf16[32,64], index: 2, kind: input, shape index: {}]
  %s3 = inlined_call_operand.hbm [shape: bf16[32,64], index: 3, kind: input, shape index: {}]
  %s4 = inlined_call_operand.hbm [shape: bf16[64,32], index: 4, kind: input, shape index: {}]
  %s5 = inlined_call_operand.hbm [shape: f32[1,32], index: 5, kind: input, shape index: {}]
  %s6 = inlined_call_operand.hbm [shape: f32[1,32], index: 6, kind: input, shape index: {}]
  %s7 = inlined_call_operand.hbm [shape: f32[16,32], index: 7, kind: output, shape index: {}]
  %s8 = sld [smem:[#allocation0]]
  $region89: #{tpu_custom_call.1} parent=0
    _
  %s10 = ssub.s32 1, %s8
  %s11 = scalar_select 0, %s10, %s8
  $region1: #{tpu_custom_call.1} parent=0
    #allocation2 [shape = 'u8[8192]{0}', space=vmem, size = 0x2000, scoped, tag = 'input window, operand 0']
    #allocation3 [shape = 's32[2]{0}', space=sflag, size = 0x8, scoped, tag = 'scoped memory for tpu_custom_call.1']
    #allocation4 [shape = 's32[2]{0}', space=sflag, size = 0x8, scoped, tag = 'scoped memory for tpu_custom_call.1']
    #allocation5 [shape = 'u8[8192]{0}', space=vmem, size = 0x2000, scoped, tag = 'input window, operand 1, single buffered']
    #allocation6 [shape = 's32[1]{0}', space=sflag, size = 0x4, scoped, tag = 'scoped memory for tpu_custom_call.1']
    #allocation7 [shape = 'u8[8192]{0}', space=vmem, size = 0x2000, scoped, tag = 'input window, operand 2, single buffered']
    #allocation8 [shape = 'u8[8192]{0}', space=vmem, size = 0x2000, scoped, tag = 'input window, operand 3, single buffered']
    #allocation9 [shape = 's32[1]{0}', space=sflag, size = 0x4, scoped, tag = 'scoped memory for tpu_custom_call.1']
    #allocation10 [shape = 'u8[16384]{0}', space=vmem, size = 0x4000, scoped, tag = 'input window, operand 4, single buffered']
    #allocation11 [shape = 'u8[512]{0}', space=vmem, size = 0x400, scoped, tag = 'input window, operand 5, single buffered']
    #allocation12 [shape = 's32[1]{0}', space=sflag, size = 0x4, scoped, tag = 'scoped memory for tpu_custom_call.1']
    #allocation13 [shape = 'u8[512]{0}', space=vmem, size = 0x400, scoped, tag = 'input window, operand 6, single buffered']
    #allocation14 [shape = 'u8[8192]{0}', space=vmem, size = 0x2000, scoped, tag = 'output window, operand 0']
    %12 = vsyncpa [#allocation3], 0
    %s13 = scalar_lea.sflag [#allocation3], 1
    %14 = vsyncpa %s13, 0
    %15 = vsyncpa [#allocation6], 0
    %16 = vsyncpa [#allocation9], 0
    %17 = vsyncpa [#allocation12], 0
    %18 = vsyncpa [#allocation4], 0
    %s19 = scalar_lea.sflag [#allocation4], 1
    %20 = vsyncpa %s19, 0
    loop: start=0, step=1, limit=4
    $region2: #{tpu_custom_call.1} parent=1 // loop_pre_header
      _
    $region3: #{tpu_custom_call.1} parent=1 // loop_header
      %s22 = sphi 0, %s26
      %p23 = scmp.ge.s32.totalorder %s22, 4
      %s32 = sphi 0, %s34
      %s35 = sphi 0, %s32
      %s36 = sphi 0, %s35
      %s52 = sphi 0, %s36
      %s56 = sphi 0, %s56
      %s58 = sphi 0, %s56
      %s59 = sphi 0, %s58
      %s73 = sphi 0, %s59
      %s77 = sphi 0, %s77
      %s79 = sphi 0, %s77
      %s80 = sphi 0, %s79
      %s94 = sphi 0, %s80
      %s98 = sphi 0, %s98
      %s100 = sphi 0, %s98
      %s101 = sphi 0, %s100
      %s115 = sphi 0, %s101
      %s119 = sphi 0, %s119
      %s121 = sphi 0, %s119
      %s122 = sphi 0, %s121
      %s136 = sphi 0, %s122
      %s140 = sphi 0, %s140
      %s142 = sphi 0, %s140
      %s143 = sphi 0, %s142
      %s157 = sphi 0, %s143
      %s161 = sphi 0, %s161
      %s163 = sphi 0, %s161
      %s164 = sphi 0, %s163
      %s178 = sphi 0, %s164
      %s184 = sphi 0, %s186
      %s187 = sphi 0, %s184
      %s188 = sphi 0, %s187
      %s204 = sphi 0, %s188
    $region4: #{tpu_custom_call.1} parent=1 // loop_header_branch
      %25 = sbr.rel (%p23) target = $region8
    $region5: #{tpu_custom_call.1} parent=1 // loop_body
      %s27 = ssub.s32 %s22, 1
      %s28 = ssub.s32 %s22, 2
      %s29 = sadd.s32 %s22, 1
      %s30 = ssub.s32 %s22, %s29
      %p31 = scmp.eq.s32.totalorder %s30, 0
      %s33 = sadd.s32 %s32, 1
      %s34 = scalar_select %p31, %s32, %s33
      %p37 = pneg %p31
      %p38 = scmp.eq.s32.totalorder %s22, 1
      %p39 = por %p37, %p38
      %p40 = scmp.ne.s32.totalorder %s32, %s35
      %p41 = scmp.eq.s32.totalorder %s22, 0
      %p42 = por %p40, %p41
      %p43 = scmp.ne.s32.totalorder %s32, %s35
      %p44 = scmp.eq.s32.totalorder %s27, 1
      %p45 = por %p43, %p44
      %p46 = scmp.ne.s32.totalorder %s35, %s36
      %p47 = scmp.eq.s32.totalorder %s27, 0
      %p48 = por %p46, %p47
      %p49 = scmp.ne.s32.totalorder %s35, %s36
      %p50 = scmp.eq.s32.totalorder %s28, 1
      %p51 = por %p49, %p50
      %p53 = scmp.ne.s32.totalorder %s36, %s52
      %p54 = scmp.eq.s32.totalorder %s28, 0
      %p55 = por %p53, %p54
      %s57 = sadd.s32 %s56, 1
      %p60 = scmp.eq.s32.totalorder %s22, 1
      %p61 = scmp.ne.s32.totalorder %s56, %s58
      %p62 = scmp.eq.s32.totalorder %s22, 0
      %p63 = por %p61, %p62
      %p64 = scmp.ne.s32.totalorder %s56, %s58
      %p65 = scmp.eq.s32.totalorder %s27, 1
      %p66 = por %p64, %p65
      %p67 = scmp.ne.s32.totalorder %s58, %s59
      %p68 = scmp.eq.s32.totalorder %s27, 0
      %p69 = por %p67, %p68
      %p70 = scmp.ne.s32.totalorder %s58, %s59
      %p71 = scmp.eq.s32.totalorder %s28, 1
      %p72 = por %p70, %p71
      %p74 = scmp.ne.s32.totalorder %s59, %s73
      %p75 = scmp.eq.s32.totalorder %s28, 0
      %p76 = por %p74, %p75
      %s78 = sadd.s32 %s77, 1
      %p81 = scmp.eq.s32.totalorder %s22, 1
      %p82 = scmp.ne.s32.totalorder %s77, %s79
      %p83 = scmp.eq.s32.totalorder %s22, 0
      %p84 = por %p82, %p83
      %p85 = scmp.ne.s32.totalorder %s77, %s79
      %p86 = scmp.eq.s32.totalorder %s27, 1
      %p87 = por %p85, %p86
      %p88 = scmp.ne.s32.totalorder %s79, %s80
      %p89 = scmp.eq.s32.totalorder %s27, 0
      %p90 = por %p88, %p89
      %p91 = scmp.ne.s32.totalorder %s79, %s80
      %p92 = scmp.eq.s32.totalorder %s28, 1
      %p93 = por %p91, %p92
      %p95 = scmp.ne.s32.totalorder %s80, %s94
      %p96 = scmp.eq.s32.totalorder %s28, 0
      %p97 = por %p95, %p96
      %s99 = sadd.s32 %s98, 1
      %p102 = scmp.eq.s32.totalorder %s22, 1
      %p103 = scmp.ne.s32.totalorder %s98, %s100
      %p104 = scmp.eq.s32.totalorder %s22, 0
      %p105 = por %p103, %p104
      %p106 = scmp.ne.s32.totalorder %s98, %s100
      %p107 = scmp.eq.s32.totalorder %s27, 1
      %p108 = por %p106, %p107
      %p109 = scmp.ne.s32.totalorder %s100, %s101
      %p110 = scmp.eq.s32.totalorder %s27, 0
      %p111 = por %p109, %p110
      %p112 = scmp.ne.s32.totalorder %s100, %s101
      %p113 = scmp.eq.s32.totalorder %s28, 1
      %p114 = por %p112, %p113
      %p116 = scmp.ne.s32.totalorder %s101, %s115
      %p117 = scmp.eq.s32.totalorder %s28, 0
      %p118 = por %p116, %p117
      %s120 = sadd.s32 %s119, 1
      %p123 = scmp.eq.s32.totalorder %s22, 1
      %p124 = scmp.ne.s32.totalorder %s119, %s121
      %p125 = scmp.eq.s32.totalorder %s22, 0
      %p126 = por %p124, %p125
      %p127 = scmp.ne.s32.totalorder %s119, %s121
      %p128 = scmp.eq.s32.totalorder %s27, 1
      %p129 = por %p127, %p128
      %p130 = scmp.ne.s32.totalorder %s121, %s122
      %p131 = scmp.eq.s32.totalorder %s27, 0
      %p132 = por %p130, %p131
      %p133 = scmp.ne.s32.totalorder %s121, %s122
      %p134 = scmp.eq.s32.totalorder %s28, 1
      %p135 = por %p133, %p134
      %p137 = scmp.ne.s32.totalorder %s122, %s136
      %p138 = scmp.eq.s32.totalorder %s28, 0
      %p139 = por %p137, %p138
      %s141 = sadd.s32 %s140, 1
      %p144 = scmp.eq.s32.totalorder %s22, 1
      %p145 = scmp.ne.s32.totalorder %s140, %s142
      %p146 = scmp.eq.s32.totalorder %s22, 0
      %p147 = por %p145, %p146
      %p148 = scmp.ne.s32.totalorder %s140, %s142
      %p149 = scmp.eq.s32.totalorder %s27, 1
      %p150 = por %p148, %p149
      %p151 = scmp.ne.s32.totalorder %s142, %s143
      %p152 = scmp.eq.s32.totalorder %s27, 0
      %p153 = por %p151, %p152
      %p154 = scmp.ne.s32.totalorder %s142, %s143
      %p155 = scmp.eq.s32.totalorder %s28, 1
      %p156 = por %p154, %p155
      %p158 = scmp.ne.s32.totalorder %s143, %s157
      %p159 = scmp.eq.s32.totalorder %s28, 0
      %p160 = por %p158, %p159
      %s162 = sadd.s32 %s161, 1
      %p165 = scmp.eq.s32.totalorder %s22, 1
      %p166 = scmp.ne.s32.totalorder %s161, %s163
      %p167 = scmp.eq.s32.totalorder %s22, 0
      %p168 = por %p166, %p167
      %p169 = scmp.ne.s32.totalorder %s161, %s163
      %p170 = scmp.eq.s32.totalorder %s27, 1
      %p171 = por %p169, %p170
      %p172 = scmp.ne.s32.totalorder %s163, %s164
      %p173 = scmp.eq.s32.totalorder %s27, 0
      %p174 = por %p172, %p173
      %p175 = scmp.ne.s32.totalorder %s163, %s164
      %p176 = scmp.eq.s32.totalorder %s28, 1
      %p177 = por %p175, %p176
      %p179 = scmp.ne.s32.totalorder %s164, %s178
      %p180 = scmp.eq.s32.totalorder %s28, 0
      %p181 = por %p179, %p180
      %s182 = ssub.s32 %s22, %s29
      %p183 = scmp.eq.s32.totalorder %s182, 0
      %s185 = sadd.s32 %s184, 1
      %s186 = scalar_select %p183, %s184, %s185
      %p189 = pneg %p183
      %p190 = scmp.eq.s32.totalorder %s22, 1
      %p191 = por %p189, %p190
      %p192 = scmp.ne.s32.totalorder %s184, %s187
      %p193 = scmp.eq.s32.totalorder %s22, 0
      %p194 = por %p192, %p193
      %p195 = scmp.ne.s32.totalorder %s184, %s187
      %p196 = scmp.eq.s32.totalorder %s27, 1
      %p197 = por %p195, %p196
      %p198 = scmp.ne.s32.totalorder %s187, %s188
      %p199 = scmp.eq.s32.totalorder %s27, 0
      %p200 = por %p198, %p199
      %p201 = scmp.ne.s32.totalorder %s187, %s188
      %p202 = scmp.eq.s32.totalorder %s28, 1
      %p203 = por %p201, %p202
      %p205 = scmp.ne.s32.totalorder %s188, %s204
      %p206 = scmp.eq.s32.totalorder %s28, 0
      %p207 = por %p205, %p206
      %p208 = scmp.le.s32.totalorder 1, %s22
      %p209 = scmp.lt.s32.totalorder %s22, 3
      %p210 = pnand %p208, %p209
      %p211 = pneg %p210
      // Predicated region
      $region9: #{tpu_custom_call.1} parent=5 // pred_check
        _
      $region10: #{tpu_custom_call.1} parent=5 // pred_check_branch
        %213 = sbr.rel (%p210) target = $region12
      $region11: #{tpu_custom_call.1} parent=5 // pred_region
        %s214 = ssub.s32 %s22, 1
        // Predicated region
        $region13: #{tpu_custom_call.1} parent=11 // pred_check
          %p215 = pneg %p69
        $region14: #{tpu_custom_call.1} parent=11 // pred_check_branch
          %217 = sbr.rel (%p215) target = $region16
        $region15: #{tpu_custom_call.1} parent=11 // pred_region
          %s219 = ssub.s32 256, 256
          %220 = vsyncadd [#allocation6], %s219
          %s221 = sshll.u32 [#allocation5], 4
          %s222 = int_to_ptr.vmem [resolvable:$true] %s221
          %227 = dma.hbm_to_vmem [thread:$0]  %s1, 256, %s222, [#allocation6], 64, 64, 4
        $region16: #{tpu_custom_call.1} parent=11 // pred_fallthru
          _
        // Predicated region
        $region17: #{tpu_custom_call.1} parent=11 // pred_check
          %p228 = pneg %p90
        $region18: #{tpu_custom_call.1} parent=11 // pred_check_branch
          %230 = sbr.rel (%p228) target = $region20
        $region19: #{tpu_custom_call.1} parent=11 // pred_region
          %s232 = ssub.s32 256, 256
          %233 = vsyncadd [#allocation6], %s232
          %s234 = sshll.u32 [#allocation7], 4
          %s235 = int_to_ptr.vmem [resolvable:$true] %s234
          %240 = dma.hbm_to_vmem [thread:$0]  %s2, 256, %s235, [#allocation6], 64, 64, 4
        $region20: #{tpu_custom_call.1} parent=11 // pred_fallthru
          _
        // Predicated region
        $region21: #{tpu_custom_call.1} parent=11 // pred_check
          %p241 = pneg %p111
        $region22: #{tpu_custom_call.1} parent=11 // pred_check_branch
          %243 = sbr.rel (%p241) target = $region24
        $region23: #{tpu_custom_call.1} parent=11 // pred_region
          %s245 = ssub.s32 256, 256
          %246 = vsyncadd [#allocation9], %s245
          %s247 = sshll.u32 [#allocation8], 4
          %s248 = int_to_ptr.vmem [resolvable:$true] %s247
          %253 = dma.hbm_to_vmem [thread:$0]  %s3, 256, %s248, [#allocation9], 64, 64, 4
        $region24: #{tpu_custom_call.1} parent=11 // pred_fallthru
          _
        // Predicated region
        $region25: #{tpu_custom_call.1} parent=11 // pred_check
          %p254 = pneg %p132
        $region26: #{tpu_custom_call.1} parent=11 // pred_check_branch
          %256 = sbr.rel (%p254) target = $region28
        $region27: #{tpu_custom_call.1} parent=11 // pred_region
          %s258 = ssub.s32 512, 512
          %259 = vsyncadd [#allocation9], %s258
          %s260 = sshll.u32 [#allocation10], 4
          %s261 = int_to_ptr.vmem [resolvable:$true] %s260
          %266 = dma.hbm_to_vmem [thread:$0]  %s4, 512, %s261, [#allocation9], 64, 64, 4
        $region28: #{tpu_custom_call.1} parent=11 // pred_fallthru
          _
        // Predicated region
        $region29: #{tpu_custom_call.1} parent=11 // pred_check
          %p267 = pneg %p153
        $region30: #{tpu_custom_call.1} parent=11 // pred_check_branch
          %269 = sbr.rel (%p267) target = $region32
        $region31: #{tpu_custom_call.1} parent=11 // pred_region
          %s271 = ssub.s32 16, 16
          %272 = vsyncadd [#allocation12], %s271
          %s274 = sshll.u32 [#allocation11], 4
          %s275 = int_to_ptr.vmem [resolvable:$true] %s274
          %277 = dma.hbm_to_vmem [thread:$0]  %s5, 16, %s275, [#allocation12]
        $region32: #{tpu_custom_call.1} parent=11 // pred_fallthru
          _
        // Predicated region
        $region33: #{tpu_custom_call.1} parent=11 // pred_check
          %p278 = pneg %p174
        $region34: #{tpu_custom_call.1} parent=11 // pred_check_branch
          %280 = sbr.rel (%p278) target = $region36
        $region35: #{tpu_custom_call.1} parent=11 // pred_region
          %s282 = ssub.s32 16, 16
          %283 = vsyncadd [#allocation12], %s282
          %s285 = sshll.u32 [#allocation13], 4
          %s286 = int_to_ptr.vmem [resolvable:$true] %s285
          %288 = dma.hbm_to_vmem [thread:$0]  %s6, 16, %s286, [#allocation12]
        $region36: #{tpu_custom_call.1} parent=11 // pred_fallthru
          _
      $region12: #{tpu_custom_call.1} parent=5 // pred_fallthru
        _
      %p289 = scmp.lt.s32.totalorder %s22, 2
      // Predicated region
      $region37: #{tpu_custom_call.1} parent=5 // pred_check
        %p290 = pneg %p289
      $region38: #{tpu_custom_call.1} parent=5 // pred_check_branch
        %292 = sbr.rel (%p290) target = $region40
      $region39: #{tpu_custom_call.1} parent=5 // pred_region
        // Predicated region
        $region41: #{tpu_custom_call.1} parent=39 // pred_check
          %p293 = pneg %p42
        $region42: #{tpu_custom_call.1} parent=39 // pred_check_branch
          %295 = sbr.rel (%p293) target = $region44
        $region43: #{tpu_custom_call.1} parent=39 // pred_region
          %s296 = sand.u32 %s32, 1
          %s297 = scalar_lea.sflag [#allocation3], %s296
          %s298 = sand.u32 %s32, 1
          %s299 = smul.addr %s298, 8
          %s300 = scalar_lea.vmem [#allocation2], %s299
          %s302 = ssub.s32 128, 128
          %303 = vsyncadd %s297, %s302
          %s304 = smul.addr %s22, 128
          %s305 = scalar_lea.hbm %s0, %s304
          %s307 = sshll.u32 %s300, 4
          %s308 = int_to_ptr.vmem [resolvable:$true] %s307
          %310 = dma.hbm_to_vmem [thread:$0]  %s305, 128, %s308, %s297
        $region44: #{tpu_custom_call.1} parent=39 // pred_fallthru
          _
      $region40: #{tpu_custom_call.1} parent=5 // pred_fallthru
        _
      %p311 = scmp.le.s32.totalorder 1, %s22
      %p312 = scmp.lt.s32.totalorder %s22, 3
      %p313 = pnand %p311, %p312
      %p314 = pneg %p313
      // Predicated region
      $region45: #{tpu_custom_call.1} parent=5 // pred_check
        _
      $region46: #{tpu_custom_call.1} parent=5 // pred_check_branch
        %316 = sbr.rel (%p313) target = $region48
      $region47: #{tpu_custom_call.1} parent=5 // pred_region
        %s317 = ssub.s32 %s22, 1
        %s318 = sand.u32 %s35, 1
        %s319 = scalar_lea.sflag [#allocation3], %s318
        %s320 = sand.u32 %s35, 1
        %s321 = smul.addr %s320, 8
        %s322 = scalar_lea.vmem [#allocation2], %s321
        // Predicated region
        $region49: #{tpu_custom_call.1} parent=47 // pred_check
          %p323 = pneg %p48
        $region50: #{tpu_custom_call.1} parent=47 // pred_check_branch
          %325 = sbr.rel (%p323) target = $region52
        $region51: #{tpu_custom_call.1} parent=47 // pred_region
          %326 = dma.done %s319, 128
        $region52: #{tpu_custom_call.1} parent=47 // pred_fallthru
          _
        // Predicated region
        $region53: #{tpu_custom_call.1} parent=47 // pred_check
          %p327 = pneg %p69
        $region54: #{tpu_custom_call.1} parent=47 // pred_check_branch
          %329 = sbr.rel (%p327) target = $region56
        $region55: #{tpu_custom_call.1} parent=47 // pred_region
          %330 = dma.done [#allocation6], 256
        $region56: #{tpu_custom_call.1} parent=47 // pred_fallthru
          _
        // Predicated region
        $region57: #{tpu_custom_call.1} parent=47 // pred_check
          %p331 = pneg %p90
        $region58: #{tpu_custom_call.1} parent=47 // pred_check_branch
          %333 = sbr.rel (%p331) target = $region60
        $region59: #{tpu_custom_call.1} parent=47 // pred_region
          %334 = dma.done [#allocation6], 256
        $region60: #{tpu_custom_call.1} parent=47 // pred_fallthru
          _
        // Predicated region
        $region61: #{tpu_custom_call.1} parent=47 // pred_check
          %p335 = pneg %p111
        $region62: #{tpu_custom_call.1} parent=47 // pred_check_branch
          %337 = sbr.rel (%p335) target = $region64
        $region63: #{tpu_custom_call.1} parent=47 // pred_region
          %338 = dma.done [#allocation9], 256
        $region64: #{tpu_custom_call.1} parent=47 // pred_fallthru
          _
        // Predicated region
        $region65: #{tpu_custom_call.1} parent=47 // pred_check
          %p339 = pneg %p132
        $region66: #{tpu_custom_call.1} parent=47 // pred_check_branch
          %341 = sbr.rel (%p339) target = $region68
        $region67: #{tpu_custom_call.1} parent=47 // pred_region
          %342 = dma.done [#allocation9], 512
        $region68: #{tpu_custom_call.1} parent=47 // pred_fallthru
          _
        // Predicated region
        $region69: #{tpu_custom_call.1} parent=47 // pred_check
          %p343 = pneg %p153
        $region70: #{tpu_custom_call.1} parent=47 // pred_check_branch
          %345 = sbr.rel (%p343) target = $region72
        $region71: #{tpu_custom_call.1} parent=47 // pred_region
          %346 = dma.done [#allocation12], 16
        $region72: #{tpu_custom_call.1} parent=47 // pred_fallthru
          _
        // Predicated region
        $region73: #{tpu_custom_call.1} parent=47 // pred_check
          %p347 = pneg %p174
        $region74: #{tpu_custom_call.1} parent=47 // pred_check_branch
          %349 = sbr.rel (%p347) target = $region76
        $region75: #{tpu_custom_call.1} parent=47 // pred_region
          %350 = dma.done [#allocation12], 16
        $region76: #{tpu_custom_call.1} parent=47 // pred_fallthru
          _
        %s351 = sand.u32 %s35, 1
        %s352 = scalar_lea.sflag [#allocation3], %s351
        %s353 = sand.u32 %s35, 1
        %s354 = smul.addr %s353, 8
        %s355 = scalar_lea.vmem [#allocation2], %s354
        %p356 = pneg %p48
        %p357 = pneg %p45
        %p358 = pneg %p69
        %p359 = pneg %p66
        %p360 = pneg %p90
        %p361 = pneg %p87
        %p362 = pneg %p111
        %p363 = pneg %p108
        %p364 = pneg %p132
        %p365 = pneg %p129
        %p366 = pneg %p153
        %p367 = pneg %p150
        %p368 = pneg %p174
        %p369 = pneg %p171
        %p370 = pneg %p200
        %p371 = pneg %p197
        %s372 = sand.u32 %s187, 1
        %s373 = scalar_lea.sflag [#allocation4], %s372
        %s374 = sand.u32 %s187, 1
        %s375 = smul.addr %s374, 8
        %s376 = scalar_lea.vmem [#allocation14], %s375
        %v378 = vld [vmem:[%s322] sm:$0xff]
        %v379 = vld [vmem:[#allocation11] sm:$0x1]
        %v380 = vld [vmem:[#allocation13] sm:$0x1]
        %vm381 = vcmask 261120
        %v382 = vsel %vm381, %v378, 0.0
        %383 = vadd.xlane.f32.xlu0 %v382
        %v384 = vpop.xlane.xlu0 %383
        %v385 = vrcp.pop 32.0
        %v386 = vmul.f32 %v384, %v385
        %v387 = vsub.f32 %v378, %v386
        %v388 = vmul.f32 %v387, %v387
        %v389 = vsel %vm381, %v388, 0.0
        %390 = vadd.xlane.f32.xlu0 %v389
        %v391 = vpop.xlane.xlu0 %390
        %v392 = vmul.f32 %v391, %v385
        %v393 = vadd.f32 %v392, 1e-05
        %v394 = vrsqrt.pop %v393
        %v395 = vmul.f32 %v387, %v394
        %v397 = vlaneseq
        %v398 = vshrl.u32 %v397, 7
        %v399 = vsub.s32 0, %v398
        %v400 = vrot.slane %v379, %v399
        %v402 = vmul.f32 %v395, %v400
        %v404 = vlaneseq
        %v405 = vshrl.u32 %v404, 7
        %v406 = vsub.s32 0, %v405
        %v407 = vrot.slane %v380, %v406
        %v409 = vadd.f32 %v402, %v407
        %v410 = vpack.c.bf16 %v409, %v409
        %v411 = vld [vmem:[#allocation5] sm:$0xf]
        %v412 = vld [vmem:[#allocation5 + $0x4] sm:$0xf]
        %v413 = vld [vmem:[#allocation5 + $0x8] sm:$0xf]
        %v414 = vld [vmem:[#allocation5 + $0xc] sm:$0xf]
        %v419 = vunpack.c.l.b16 %v411
        %v420 = vunpack.c.l.b16 %v412
        %v421 = vunpack.c.l.b16 %v413
        %v422 = vunpack.c.l.b16 %v414
        %v423 = vpack.c.b16 %v420, %v419
        %v424 = vpack.c.b16 %v422, %v421
        %v428 = vsel %vm381, %v410, 0
        %430 = vmatprep.subr.bf16.mxu0 0
        %431 = vmatpush1.bf16.msra.mxu0 %v423
        %432 = vmatprep.subr.bf16.mxu0 0
        %433 = vmatpush1.bf16.msra.mxu0 %v424
        %434 = vmatprep.subr.bf16.mxu0 0
        %435 = vmatpush1.bf16.msra.mxu0 0
        %436 = vmatprep.subr.bf16.mxu0 0
        %437 = vmatpush1.bf16.msra.mxu0 0
        %438 = vmatprep.subr.bf16.mxu0 0
        %439 = vmatpush1.bf16.msra.mxu0 0
        %440 = vmatprep.subr.bf16.mxu0 0
        %441 = vmatpush1.bf16.msra.mxu0 0
        %442 = vmatprep.subr.bf16.mxu0 0
        %443 = vmatpush1.bf16.msra.mxu0 0
        %444 = vmatprep.subr.bf16.mxu0 0
        %445 = vmatpush1.bf16.msra.mxu0 0
        %446 = vmatprep.subr.bf16.mxu0 0
        %447 = vmatpush1.bf16.msra.mxu0 0
        %448 = vmatprep.subr.bf16.mxu0 0
        %449 = vmatpush1.bf16.msra.mxu0 0
        %450 = vmatprep.subr.bf16.mxu0 0
        %451 = vmatpush1.bf16.msra.mxu0 0
        %452 = vmatprep.subr.bf16.mxu0 0
        %453 = vmatpush1.bf16.msra.mxu0 0
        %454 = vmatprep.subr.bf16.mxu0 0
        %455 = vmatpush1.bf16.msra.mxu0 0
        %456 = vmatprep.subr.bf16.mxu0 0
        %457 = vmatpush1.bf16.msra.mxu0 0
        %458 = vmatprep.subr.bf16.mxu0 0
        %459 = vmatpush1.bf16.msra.mxu0 0
        %460 = vmatprep.subr.bf16.mxu0 0
        %461 = vmatpush1.bf16.msra.mxu0 0
        %462 = vmatprep.mubr.bf16.mxu0 0
        %463 = vmatmul.mubr.bf16.gmra.mrb[0].mxu0 %v428
        %v464 = vpop.f32.mrb[0].mxu0
        %v465 = vadd.f32 0.0, %v464
        %v466 = vpop.f32.mrb[0].mxu0
        %v467 = vpop.f32.mrb[0].mxu0
        %v468 = vpop.f32.mrb[0].mxu0
        %469 = vdwg.mxu0
        %v470 = vld [vmem:[#allocation7] sm:$0xf]
        %v471 = vld [vmem:[#allocation7 + $0x4] sm:$0xf]
        %v472 = vld [vmem:[#allocation7 + $0x8] sm:$0xf]
        %v473 = vld [vmem:[#allocation7 + $0xc] sm:$0xf]
        %v478 = vunpack.c.l.b16 %v470
        %v479 = vunpack.c.l.b16 %v471
        %v480 = vunpack.c.l.b16 %v472
        %v481 = vunpack.c.l.b16 %v473
        %v482 = vpack.c.b16 %v479, %v478
        %v483 = vpack.c.b16 %v481, %v480
        %486 = vmatprep.subr.bf16.mxu0 0
        %487 = vmatpush1.bf16.msra.mxu0 %v482
        %488 = vmatprep.subr.bf16.mxu0 0
        %489 = vmatpush1.bf16.msra.mxu0 %v483
        %490 = vmatprep.subr.bf16.mxu0 0
        %491 = vmatpush1.bf16.msra.mxu0 0
        %492 = vmatprep.subr.bf16.mxu0 0
        %493 = vmatpush1.bf16.msra.mxu0 0
        %494 = vmatprep.subr.bf16.mxu0 0
        %495 = vmatpush1.bf16.msra.mxu0 0
        %496 = vmatprep.subr.bf16.mxu0 0
        %497 = vmatpush1.bf16.msra.mxu0 0
        %498 = vmatprep.subr.bf16.mxu0 0
        %499 = vmatpush1.bf16.msra.mxu0 0
        %500 = vmatprep.subr.bf16.mxu0 0
        %501 = vmatpush1.bf16.msra.mxu0 0
        %502 = vmatprep.subr.bf16.mxu0 0
        %503 = vmatpush1.bf16.msra.mxu0 0
        %504 = vmatprep.subr.bf16.mxu0 0
        %505 = vmatpush1.bf16.msra.mxu0 0
        %506 = vmatprep.subr.bf16.mxu0 0
        %507 = vmatpush1.bf16.msra.mxu0 0
        %508 = vmatprep.subr.bf16.mxu0 0
        %509 = vmatpush1.bf16.msra.mxu0 0
        %510 = vmatprep.subr.bf16.mxu0 0
        %511 = vmatpush1.bf16.msra.mxu0 0
        %512 = vmatprep.subr.bf16.mxu0 0
        %513 = vmatpush1.bf16.msra.mxu0 0
        %514 = vmatprep.subr.bf16.mxu0 0
        %515 = vmatpush1.bf16.msra.mxu0 0
        %516 = vmatprep.subr.bf16.mxu0 0
        %517 = vmatpush1.bf16.msra.mxu0 0
        %518 = vmatprep.mubr.bf16.mxu0 0
        %519 = vmatmul.mubr.bf16.gmra.mrb[0].mxu0 %v428
        %v520 = vpop.f32.mrb[0].mxu0
        %v521 = vadd.f32 0.0, %v520
        %v522 = vpop.f32.mrb[0].mxu0
        %v523 = vpop.f32.mrb[0].mxu0
        %v524 = vpop.f32.mrb[0].mxu0
        %525 = vdwg.mxu0
        %v526 = vld [vmem:[#allocation8] sm:$0xf]
        %v527 = vld [vmem:[#allocation8 + $0x4] sm:$0xf]
        %v528 = vld [vmem:[#allocation8 + $0x8] sm:$0xf]
        %v529 = vld [vmem:[#allocation8 + $0xc] sm:$0xf]
        %v534 = vunpack.c.l.b16 %v526
        %v535 = vunpack.c.l.b16 %v527
        %v536 = vunpack.c.l.b16 %v528
        %v537 = vunpack.c.l.b16 %v529
        %v538 = vpack.c.b16 %v535, %v534
        %v539 = vpack.c.b16 %v537, %v536
        %542 = vmatprep.subr.bf16.mxu0 0
        %543 = vmatpush1.bf16.msra.mxu0 %v538
        %544 = vmatprep.subr.bf16.mxu0 0
        %545 = vmatpush1.bf16.msra.mxu0 %v539
        %546 = vmatprep.subr.bf16.mxu0 0
        %547 = vmatpush1.bf16.msra.mxu0 0
        %548 = vmatprep.subr.bf16.mxu0 0
        %549 = vmatpush1.bf16.msra.mxu0 0
        %550 = vmatprep.subr.bf16.mxu0 0
        %551 = vmatpush1.bf16.msra.mxu0 0
        %552 = vmatprep.subr.bf16.mxu0 0
        %553 = vmatpush1.bf16.msra.mxu0 0
        %554 = vmatprep.subr.bf16.mxu0 0
        %555 = vmatpush1.bf16.msra.mxu0 0
        %556 = vmatprep.subr.bf16.mxu0 0
        %557 = vmatpush1.bf16.msra.mxu0 0
        %558 = vmatprep.subr.bf16.mxu0 0
        %559 = vmatpush1.bf16.msra.mxu0 0
        %560 = vmatprep.subr.bf16.mxu0 0
        %561 = vmatpush1.bf16.msra.mxu0 0
        %562 = vmatprep.subr.bf16.mxu0 0
        %563 = vmatpush1.bf16.msra.mxu0 0
        %564 = vmatprep.subr.bf16.mxu0 0
        %565 = vmatpush1.bf16.msra.mxu0 0
        %566 = vmatprep.subr.bf16.mxu0 0
        %567 = vmatpush1.bf16.msra.mxu0 0
        %568 = vmatprep.subr.bf16.mxu0 0
        %569 = vmatpush1.bf16.msra.mxu0 0
        %570 = vmatprep.subr.bf16.mxu0 0
        %571 = vmatpush1.bf16.msra.mxu0 0
        %572 = vmatprep.subr.bf16.mxu0 0
        %573 = vmatpush1.bf16.msra.mxu0 0
        %574 = vmatprep.mubr.bf16.mxu0 0
        %575 = vmatmul.mubr.bf16.gmra.mrb[0].mxu0 %v428
        %v576 = vpop.f32.mrb[0].mxu0
        %v577 = vadd.f32 0.0, %v576
        %v578 = vpop.f32.mrb[0].mxu0
        %v579 = vpop.f32.mrb[0].mxu0
        %v580 = vpop.f32.mrb[0].mxu0
        %581 = vdwg.mxu0
        %v582 = vpack.c.bf16 %v465, %v465
        %584 = vrot.lane.b32.xlu0 %v582, 112
        %v585 = vpop.permute.xlu0 %584
        %586 = vrot.lane.b32.xlu0 %v582, 96
        %v587 = vpop.permute.xlu0 %586
        %588 = vrot.lane.b32.xlu0 %v582, 80
        %v589 = vpop.permute.xlu0 %588
        %v590 = vpack.c.bf16 %v521, %v521
        %592 = vrot.lane.b32.xlu0 %v590, 112
        %v593 = vpop.permute.xlu0 %592
        %594 = vrot.lane.b32.xlu0 %v590, 96
        %v595 = vpop.permute.xlu0 %594
        %596 = vrot.lane.b32.xlu0 %v590, 80
        %v597 = vpop.permute.xlu0 %596
        %v598 = vpack.c.bf16 %v577, %v577
        %600 = vrot.lane.b32.xlu0 %v598, 112
        %v601 = vpop.permute.xlu0 %600
        %602 = vrot.lane.b32.xlu0 %v598, 96
        %v603 = vpop.permute.xlu0 %602
        %604 = vrot.lane.b32.xlu0 %v598, 80
        %v605 = vpop.permute.xlu0 %604
        %vm606 = vcmask 130048
        %v608 = vsel %vm606, %v582, 0
        %v611 = vsel %vm606, %v590, 0
        %613 = vmatprep.subr.bf16.mxu0 0
        %614 = vmatpush1.bf16.xpose.msra.mxu0 %v611
        %615 = vmatprep.subr.bf16.mxu0 0
        %616 = vmatpush1.bf16.xpose.msra.mxu0 0
        %617 = vmatprep.subr.bf16.mxu0 0
        %618 = vmatpush1.bf16.xpose.msra.mxu0 0
        %619 = vmatprep.subr.bf16.mxu0 0
        %620 = vmatpush1.bf16.xpose.msra.mxu0 0
        %621 = vmatprep.subr.bf16.mxu0 0
        %622 = vmatpush1.bf16.xpose.msra.mxu0 0
        %623 = vmatprep.subr.bf16.mxu0 0
        %624 = vmatpush1.bf16.xpose.msra.mxu0 0
        %625 = vmatprep.subr.bf16.mxu0 0
        %626 = vmatpush1.bf16.xpose.msra.mxu0 0
        %627 = vmatprep.subr.bf16.mxu0 0
        %628 = vmatpush1.bf16.xpose.msra.mxu0 0
        %629 = vmatprep.subr.bf16.mxu0 0
        %630 = vmatpush1.bf16.xpose.msra.mxu0 0
        %631 = vmatprep.subr.bf16.mxu0 0
        %632 = vmatpush1.bf16.xpose.msra.mxu0 0
        %633 = vmatprep.subr.bf16.mxu0 0
        %634 = vmatpush1.bf16.xpose.msra.mxu0 0
        %635 = vmatprep.subr.bf16.mxu0 0
        %636 = vmatpush1.bf16.xpose.msra.mxu0 0
        %637 = vmatprep.subr.bf16.mxu0 0
        %638 = vmatpush1.bf16.xpose.msra.mxu0 0
        %639 = vmatprep.subr.bf16.mxu0 0
        %640 = vmatpush1.bf16.xpose.msra.mxu0 0
        %641 = vmatprep.subr.bf16.mxu0 0
        %642 = vmatpush1.bf16.xpose.msra.mxu0 0
        %643 = vmatprep.subr.bf16.mxu0 0
        %644 = vmatpush1.bf16.xpose.msra.mxu0 0
        %645 = vmatprep.mubr.bf16.mxu0 0
        %646 = vmatmul.mubr.bf16.gmra.mrb[0].mxu0 %v608
        %v647 = vpop.f32.mrb[0].mxu0
        %v648 = vadd.f32 0.0, %v647
        %v649 = vpop.f32.mrb[0].mxu0
        %v650 = vpop.f32.mrb[0].mxu0
        %v651 = vpop.f32.mrb[0].mxu0
        %652 = vdwg.mxu0
        %v654 = vsel %vm606, %v585, 0
        %v657 = vsel %vm606, %v593, 0
        %659 = vmatprep.subr.bf16.mxu0 0
        %660 = vmatpush1.bf16.xpose.msra.mxu0 %v657
        %661 = vmatprep.subr.bf16.mxu0 0
        %662 = vmatpush1.bf16.xpose.msra.mxu0 0
        %663 = vmatprep.subr.bf16.mxu0 0
        %664 = vmatpush1.bf16.xpose.msra.mxu0 0
        %665 = vmatprep.subr.bf16.mxu0 0
        %666 = vmatpush1.bf16.xpose.msra.mxu0 0
        %667 = vmatprep.subr.bf16.mxu0 0
        %668 = vmatpush1.bf16.xpose.msra.mxu0 0
        %669 = vmatprep.subr.bf16.mxu0 0
        %670 = vmatpush1.bf16.xpose.msra.mxu0 0
        %671 = vmatprep.subr.bf16.mxu0 0
        %672 = vmatpush1.bf16.xpose.msra.mxu0 0
        %673 = vmatprep.subr.bf16.mxu0 0
        %674 = vmatpush1.bf16.xpose.msra.mxu0 0
        %675 = vmatprep.subr.bf16.mxu0 0
        %676 = vmatpush1.bf16.xpose.msra.mxu0 0
        %677 = vmatprep.subr.bf16.mxu0 0
        %678 = vmatpush1.bf16.xpose.msra.mxu0 0
        %679 = vmatprep.subr.bf16.mxu0 0
        %680 = vmatpush1.bf16.xpose.msra.mxu0 0
        %681 = vmatprep.subr.bf16.mxu0 0
        %682 = vmatpush1.bf16.xpose.msra.mxu0 0
        %683 = vmatprep.subr.bf16.mxu0 0
        %684 = vmatpush1.bf16.xpose.msra.mxu0 0
        %685 = vmatprep.subr.bf16.mxu0 0
        %686 = vmatpush1.bf16.xpose.msra.mxu0 0
        %687 = vmatprep.subr.bf16.mxu0 0
        %688 = vmatpush1.bf16.xpose.msra.mxu0 0
        %689 = vmatprep.subr.bf16.mxu0 0
        %690 = vmatpush1.bf16.xpose.msra.mxu0 0
        %691 = vmatprep.mubr.bf16.mxu0 0
        %692 = vmatmul.mubr.bf16.gmra.mrb[0].mxu0 %v654
        %v693 = vpop.f32.mrb[0].mxu0
        %v694 = vadd.f32 0.0, %v693
        %v695 = vpop.f32.mrb[0].mxu0
        %v696 = vpop.f32.mrb[0].mxu0
        %v697 = vpop.f32.mrb[0].mxu0
        %698 = vdwg.mxu0
        %v700 = vsel %vm606, %v587, 0
        %v703 = vsel %vm606, %v595, 0
        %705 = vmatprep.subr.bf16.mxu0 0
        %706 = vmatpush1.bf16.xpose.msra.mxu0 %v703
        %707 = vmatprep.subr.bf16.mxu0 0
        %708 = vmatpush1.bf16.xpose.msra.mxu0 0
        %709 = vmatprep.subr.bf16.mxu0 0
        %710 = vmatpush1.bf16.xpose.msra.mxu0 0
        %711 = vmatprep.subr.bf16.mxu0 0
        %712 = vmatpush1.bf16.xpose.msra.mxu0 0
        %713 = vmatprep.subr.bf16.mxu0 0
        %714 = vmatpush1.bf16.xpose.msra.mxu0 0
        %715 = vmatprep.subr.bf16.mxu0 0
        %716 = vmatpush1.bf16.xpose.msra.mxu0 0
        %717 = vmatprep.subr.bf16.mxu0 0
        %718 = vmatpush1.bf16.xpose.msra.mxu0 0
        %719 = vmatprep.subr.bf16.mxu0 0
        %720 = vmatpush1.bf16.xpose.msra.mxu0 0
        %721 = vmatprep.subr.bf16.mxu0 0
        %722 = vmatpush1.bf16.xpose.msra.mxu0 0
        %723 = vmatprep.subr.bf16.mxu0 0
        %724 = vmatpush1.bf16.xpose.msra.mxu0 0
        %725 = vmatprep.subr.bf16.mxu0 0
        %726 = vmatpush1.bf16.xpose.msra.mxu0 0
        %727 = vmatprep.subr.bf16.mxu0 0
        %728 = vmatpush1.bf16.xpose.msra.mxu0 0
        %729 = vmatprep.subr.bf16.mxu0 0
        %730 = vmatpush1.bf16.xpose.msra.mxu0 0
        %731 = vmatprep.subr.bf16.mxu0 0
        %732 = vmatpush1.bf16.xpose.msra.mxu0 0
        %733 = vmatprep.subr.bf16.mxu0 0
        %734 = vmatpush1.bf16.xpose.msra.mxu0 0
        %735 = vmatprep.subr.bf16.mxu0 0
        %736 = vmatpush1.bf16.xpose.msra.mxu0 0
        %737 = vmatprep.mubr.bf16.mxu0 0
        %738 = vmatmul.mubr.bf16.gmra.mrb[0].mxu0 %v700
        %v739 = vpop.f32.mrb[0].mxu0
        %v740 = vadd.f32 0.0, %v739
        %v741 = vpop.f32.mrb[0].mxu0
        %v742 = vpop.f32.mrb[0].mxu0
        %v743 = vpop.f32.mrb[0].mxu0
        %744 = vdwg.mxu0
        %v746 = vsel %vm606, %v589, 0
        %v749 = vsel %vm606, %v597, 0
        %751 = vmatprep.subr.bf16.mxu0 0
        %752 = vmatpush1.bf16.xpose.msra.mxu0 %v749
        %753 = vmatprep.subr.bf16.mxu0 0
        %754 = vmatpush1.bf16.xpose.msra.mxu0 0
        %755 = vmatprep.subr.bf16.mxu0 0
        %756 = vmatpush1.bf16.xpose.msra.mxu0 0
        %757 = vmatprep.subr.bf16.mxu0 0
        %758 = vmatpush1.bf16.xpose.msra.mxu0 0
        %759 = vmatprep.subr.bf16.mxu0 0
        %760 = vmatpush1.bf16.xpose.msra.mxu0 0
        %761 = vmatprep.subr.bf16.mxu0 0
        %762 = vmatpush1.bf16.xpose.msra.mxu0 0
        %763 = vmatprep.subr.bf16.mxu0 0
        %764 = vmatpush1.bf16.xpose.msra.mxu0 0
        %765 = vmatprep.subr.bf16.mxu0 0
        %766 = vmatpush1.bf16.xpose.msra.mxu0 0
        %767 = vmatprep.subr.bf16.mxu0 0
        %768 = vmatpush1.bf16.xpose.msra.mxu0 0
        %769 = vmatprep.subr.bf16.mxu0 0
        %770 = vmatpush1.bf16.xpose.msra.mxu0 0
        %771 = vmatprep.subr.bf16.mxu0 0
        %772 = vmatpush1.bf16.xpose.msra.mxu0 0
        %773 = vmatprep.subr.bf16.mxu0 0
        %774 = vmatpush1.bf16.xpose.msra.mxu0 0
        %775 = vmatprep.subr.bf16.mxu0 0
        %776 = vmatpush1.bf16.xpose.msra.mxu0 0
        %777 = vmatprep.subr.bf16.mxu0 0
        %778 = vmatpush1.bf16.xpose.msra.mxu0 0
        %779 = vmatprep.subr.bf16.mxu0 0
        %780 = vmatpush1.bf16.xpose.msra.mxu0 0
        %781 = vmatprep.subr.bf16.mxu0 0
        %782 = vmatpush1.bf16.xpose.msra.mxu0 0
        %783 = vmatprep.mubr.bf16.mxu0 0
        %784 = vmatmul.mubr.bf16.gmra.mrb[0].mxu0 %v746
        %v785 = vpop.f32.mrb[0].mxu0
        %v786 = vadd.f32 0.0, %v785
        %v787 = vpop.f32.mrb[0].mxu0
        %v788 = vpop.f32.mrb[0].mxu0
        %v789 = vpop.f32.mrb[0].mxu0
        %790 = vdwg.mxu0
        %vm791 = vcmask 64512
        %v792 = vsel %vm791, %v648, -inf
        %793 = vmax.xlane.f32.xlu0 %v792
        %v794 = vpop.xlane.xlu0 %793
        %v795 = vsel %vm791, %v694, -inf
        %796 = vmax.xlane.f32.xlu0 %v795
        %v797 = vpop.xlane.xlu0 %796
        %v798 = vsel %vm791, %v740, -inf
        %799 = vmax.xlane.f32.xlu0 %v798
        %v800 = vpop.xlane.xlu0 %799
        %v801 = vsel %vm791, %v786, -inf
        %802 = vmax.xlane.f32.xlu0 %v801
        %v803 = vpop.xlane.xlu0 %802
        %v804 = vsub.f32 %v648, %v794
        %v805 = vsub.f32 %v694, %v797
        %v806 = vsub.f32 %v740, %v800
        %v807 = vsub.f32 %v786, %v803
        %v808 = vmul.f32 %v804, 1.442695
        %v809 = vpow.pop %v808
        %v810 = vmul.f32 %v805, 1.442695
        %v811 = vpow.pop %v810
        %v812 = vmul.f32 %v806, 1.442695
        %v813 = vpow.pop %v812
        %v814 = vmul.f32 %v807, 1.442695
        %v815 = vpow.pop %v814
        %v816 = vsel %vm791, %v809, 0.0
        %817 = vadd.xlane.f32.xlu0 %v816
        %v818 = vpop.xlane.xlu0 %817
        %v819 = vsel %vm791, %v811, 0.0
        %820 = vadd.xlane.f32.xlu0 %v819
        %v821 = vpop.xlane.xlu0 %820
        %v822 = vsel %vm791, %v813, 0.0
        %823 = vadd.xlane.f32.xlu0 %v822
        %v824 = vpop.xlane.xlu0 %823
        %v825 = vsel %vm791, %v815, 0.0
        %826 = vadd.xlane.f32.xlu0 %v825
        %v827 = vpop.xlane.xlu0 %826
        %v828 = vrcp.pop %v818
        %v829 = vrcp.pop %v821
        %v830 = vrcp.pop %v824
        %v831 = vrcp.pop %v827
        %v832 = vmul.f32 %v809, %v828
        %v833 = vmul.f32 %v811, %v829
        %v834 = vmul.f32 %v813, %v830
        %v835 = vmul.f32 %v815, %v831
        %v836 = vpack.c.bf16 %v832, %v832
        %v837 = vpack.c.bf16 %v833, %v833
        %v838 = vpack.c.bf16 %v834, %v834
        %v839 = vpack.c.bf16 %v835, %v835
        %v841 = vsel %vm791, %v836, 0
        %vm843 = vcmask 1043456
        %v845 = vsel %vm843, %v598, 0
        %847 = vmatprep.subr.bf16.mxu0 0
        %848 = vmatpush1.bf16.msra.mxu0 %v845
        %849 = vmatprep.subr.bf16.mxu0 0
        %850 = vmatpush1.bf16.msra.mxu0 0
        %851 = vmatprep.subr.bf16.mxu0 0
        %852 = vmatpush1.bf16.msra.mxu0 0
        %853 = vmatprep.subr.bf16.mxu0 0
        %854 = vmatpush1.bf16.msra.mxu0 0
        %855 = vmatprep.subr.bf16.mxu0 0
        %856 = vmatpush1.bf16.msra.mxu0 0
        %857 = vmatprep.subr.bf16.mxu0 0
        %858 = vmatpush1.bf16.msra.mxu0 0
        %859 = vmatprep.subr.bf16.mxu0 0
        %860 = vmatpush1.bf16.msra.mxu0 0
        %861 = vmatprep.subr.bf16.mxu0 0
        %862 = vmatpush1.bf16.msra.mxu0 0
        %863 = vmatprep.subr.bf16.mxu0 0
        %864 = vmatpush1.bf16.msra.mxu0 0
        %865 = vmatprep.subr.bf16.mxu0 0
        %866 = vmatpush1.bf16.msra.mxu0 0
        %867 = vmatprep.subr.bf16.mxu0 0
        %868 = vmatpush1.bf16.msra.mxu0 0
        %869 = vmatprep.subr.bf16.mxu0 0
        %870 = vmatpush1.bf16.msra.mxu0 0
        %871 = vmatprep.subr.bf16.mxu0 0
        %872 = vmatpush1.bf16.msra.mxu0 0
        %873 = vmatprep.subr.bf16.mxu0 0
        %874 = vmatpush1.bf16.msra.mxu0 0
        %875 = vmatprep.subr.bf16.mxu0 0
        %876 = vmatpush1.bf16.msra.mxu0 0
        %877 = vmatprep.subr.bf16.mxu0 0
        %878 = vmatpush1.bf16.msra.mxu0 0
        %879 = vmatprep.mubr.bf16.mxu0 0
        %880 = vmatmul.mubr.bf16.gmra.mrb[0].mxu0 %v841
        %v881 = vpop.f32.mrb[0].mxu0
        %v882 = vadd.f32 0.0, %v881
        %v883 = vpop.f32.mrb[0].mxu0
        %v884 = vpop.f32.mrb[0].mxu0
        %v885 = vpop.f32.mrb[0].mxu0
        %886 = vdwg.mxu0
        %v888 = vsel %vm791, %v837, 0
        %v891 = vsel %vm843, %v601, 0
        %893 = vmatprep.subr.bf16.mxu0 0
        %894 = vmatpush1.bf16.msra.mxu0 %v891
        %895 = vmatprep.subr.bf16.mxu0 0
        %896 = vmatpush1.bf16.msra.mxu0 0
        %897 = vmatprep.subr.bf16.mxu0 0
        %898 = vmatpush1.bf16.msra.mxu0 0
        %899 = vmatprep.subr.bf16.mxu0 0
        %900 = vmatpush1.bf16.msra.mxu0 0
        %901 = vmatprep.subr.bf16.mxu0 0
        %902 = vmatpush1.bf16.msra.mxu0 0
        %903 = vmatprep.subr.bf16.mxu0 0
        %904 = vmatpush1.bf16.msra.mxu0 0
        %905 = vmatprep.subr.bf16.mxu0 0
        %906 = vmatpush1.bf16.msra.mxu0 0
        %907 = vmatprep.subr.bf16.mxu0 0
        %908 = vmatpush1.bf16.msra.mxu0 0
        %909 = vmatprep.subr.bf16.mxu0 0
        %910 = vmatpush1.bf16.msra.mxu0 0
        %911 = vmatprep.subr.bf16.mxu0 0
        %912 = vmatpush1.bf16.msra.mxu0 0
        %913 = vmatprep.subr.bf16.mxu0 0
        %914 = vmatpush1.bf16.msra.mxu0 0
        %915 = vmatprep.subr.bf16.mxu0 0
        %916 = vmatpush1.bf16.msra.mxu0 0
        %917 = vmatprep.subr.bf16.mxu0 0
        %918 = vmatpush1.bf16.msra.mxu0 0
        %919 = vmatprep.subr.bf16.mxu0 0
        %920 = vmatpush1.bf16.msra.mxu0 0
        %921 = vmatprep.subr.bf16.mxu0 0
        %922 = vmatpush1.bf16.msra.mxu0 0
        %923 = vmatprep.subr.bf16.mxu0 0
        %924 = vmatpush1.bf16.msra.mxu0 0
        %925 = vmatprep.mubr.bf16.mxu0 0
        %926 = vmatmul.mubr.bf16.gmra.mrb[0].mxu0 %v888
        %v927 = vpop.f32.mrb[0].mxu0
        %v928 = vadd.f32 0.0, %v927
        %v929 = vpop.f32.mrb[0].mxu0
        %v930 = vpop.f32.mrb[0].mxu0
        %v931 = vpop.f32.mrb[0].mxu0
        %932 = vdwg.mxu0
        %v934 = vsel %vm791, %v838, 0
        %v937 = vsel %vm843, %v603, 0
        %939 = vmatprep.subr.bf16.mxu0 0
        %940 = vmatpush1.bf16.msra.mxu0 %v937
        %941 = vmatprep.subr.bf16.mxu0 0
        %942 = vmatpush1.bf16.msra.mxu0 0
        %943 = vmatprep.subr.bf16.mxu0 0
        %944 = vmatpush1.bf16.msra.mxu0 0
        %945 = vmatprep.subr.bf16.mxu0 0
        %946 = vmatpush1.bf16.msra.mxu0 0
        %947 = vmatprep.subr.bf16.mxu0 0
        %948 = vmatpush1.bf16.msra.mxu0 0
        %949 = vmatprep.subr.bf16.mxu0 0
        %950 = vmatpush1.bf16.msra.mxu0 0
        %951 = vmatprep.subr.bf16.mxu0 0
        %952 = vmatpush1.bf16.msra.mxu0 0
        %953 = vmatprep.subr.bf16.mxu0 0
        %954 = vmatpush1.bf16.msra.mxu0 0
        %955 = vmatprep.subr.bf16.mxu0 0
        %956 = vmatpush1.bf16.msra.mxu0 0
        %957 = vmatprep.subr.bf16.mxu0 0
        %958 = vmatpush1.bf16.msra.mxu0 0
        %959 = vmatprep.subr.bf16.mxu0 0
        %960 = vmatpush1.bf16.msra.mxu0 0
        %961 = vmatprep.subr.bf16.mxu0 0
        %962 = vmatpush1.bf16.msra.mxu0 0
        %963 = vmatprep.subr.bf16.mxu0 0
        %964 = vmatpush1.bf16.msra.mxu0 0
        %965 = vmatprep.subr.bf16.mxu0 0
        %966 = vmatpush1.bf16.msra.mxu0 0
        %967 = vmatprep.subr.bf16.mxu0 0
        %968 = vmatpush1.bf16.msra.mxu0 0
        %969 = vmatprep.subr.bf16.mxu0 0
        %970 = vmatpush1.bf16.msra.mxu0 0
        %971 = vmatprep.mubr.bf16.mxu0 0
        %972 = vmatmul.mubr.bf16.gmra.mrb[0].mxu0 %v934
        %v973 = vpop.f32.mrb[0].mxu0
        %v974 = vadd.f32 0.0, %v973
        %v975 = vpop.f32.mrb[0].mxu0
        %v976 = vpop.f32.mrb[0].mxu0
        %v977 = vpop.f32.mrb[0].mxu0
        %978 = vdwg.mxu0
        %v980 = vsel %vm791, %v839, 0
        %v983 = vsel %vm843, %v605, 0
        %985 = vmatprep.subr.bf16.mxu0 0
        %986 = vmatpush1.bf16.msra.mxu0 %v983
        %987 = vmatprep.subr.bf16.mxu0 0
        %988 = vmatpush1.bf16.msra.mxu0 0
        %989 = vmatprep.subr.bf16.mxu0 0
        %990 = vmatpush1.bf16.msra.mxu0 0
        %991 = vmatprep.subr.bf16.mxu0 0
        %992 = vmatpush1.bf16.msra.mxu0 0
        %993 = vmatprep.subr.bf16.mxu0 0
        %994 = vmatpush1.bf16.msra.mxu0 0
        %995 = vmatprep.subr.bf16.mxu0 0
        %996 = vmatpush1.bf16.msra.mxu0 0
        %997 = vmatprep.subr.bf16.mxu0 0
        %998 = vmatpush1.bf16.msra.mxu0 0
        %999 = vmatprep.subr.bf16.mxu0 0
        %1000 = vmatpush1.bf16.msra.mxu0 0
        %1001 = vmatprep.subr.bf16.mxu0 0
        %1002 = vmatpush1.bf16.msra.mxu0 0
        %1003 = vmatprep.subr.bf16.mxu0 0
        %1004 = vmatpush1.bf16.msra.mxu0 0
        %1005 = vmatprep.subr.bf16.mxu0 0
        %1006 = vmatpush1.bf16.msra.mxu0 0
        %1007 = vmatprep.subr.bf16.mxu0 0
        %1008 = vmatpush1.bf16.msra.mxu0 0
        %1009 = vmatprep.subr.bf16.mxu0 0
        %1010 = vmatpush1.bf16.msra.mxu0 0
        %1011 = vmatprep.subr.bf16.mxu0 0
        %1012 = vmatpush1.bf16.msra.mxu0 0
        %1013 = vmatprep.subr.bf16.mxu0 0
        %1014 = vmatpush1.bf16.msra.mxu0 0
        %1015 = vmatprep.subr.bf16.mxu0 0
        %1016 = vmatpush1.bf16.msra.mxu0 0
        %1017 = vmatprep.mubr.bf16.mxu0 0
        %1018 = vmatmul.mubr.bf16.gmra.mrb[0].mxu0 %v980
        %v1019 = vpop.f32.mrb[0].mxu0
        %v1020 = vadd.f32 0.0, %v1019
        %v1021 = vpop.f32.mrb[0].mxu0
        %v1022 = vpop.f32.mrb[0].mxu0
        %v1023 = vpop.f32.mrb[0].mxu0
        %1024 = vdwg.mxu0
        %v1025 = vpack.c.bf16 %v882, %v882
        %v1026 = vpack.c.bf16 %v928, %v928
        %v1027 = vpack.c.bf16 %v974, %v974
        %v1028 = vpack.c.bf16 %v1020, %v1020
        %1030 = vrot.lane.b32.xlu0 %v1026, 16
        %v1031 = vpop.permute.xlu0 %1030
        %1033 = vrot.lane.b32.xlu0 %v1027, 32
        %v1034 = vpop.permute.xlu0 %1033
        %1036 = vrot.lane.b32.xlu0 %v1028, 48
        %v1037 = vpop.permute.xlu0 %1036
        %v1040 = vsel %vm606, %v1025, %v1031
        %v1042 = vsel %vm381, %v1040, %v1034
        %vm1043 = vcmask 392192
        %v1045 = vsel %vm1043, %v1042, %v1037
        %v1046 = vld [vmem:[#allocation10] sm:$0xf]
        %v1047 = vld [vmem:[#allocation10 + $0x4] sm:$0xf]
        %v1048 = vld [vmem:[#allocation10 + $0x8] sm:$0xf]
        %v1049 = vld [vmem:[#allocation10 + $0xc] sm:$0xf]
        %v1050 = vld [vmem:[#allocation10 + $0x10] sm:$0xf]
        %v1051 = vld [vmem:[#allocation10 + $0x14] sm:$0xf]
        %v1052 = vld [vmem:[#allocation10 + $0x18] sm:$0xf]
        %v1053 = vld [vmem:[#allocation10 + $0x1c] sm:$0xf]
        %v1062 = vunpack.c.l.b16 %v1046
        %v1063 = vunpack.c.l.b16 %v1047
        %v1064 = vunpack.c.l.b16 %v1048
        %v1065 = vunpack.c.l.b16 %v1049
        %v1066 = vunpack.c.l.b16 %v1050
        %v1067 = vunpack.c.l.b16 %v1051
        %v1068 = vunpack.c.l.b16 %v1052
        %v1069 = vunpack.c.l.b16 %v1053
        %v1070 = vpack.c.b16 %v1063, %v1062
        %v1071 = vpack.c.b16 %v1065, %v1064
        %v1072 = vpack.c.b16 %v1067, %v1066
        %v1073 = vpack.c.b16 %v1069, %v1068
        %vm1078 = vcmask 523264
        %v1079 = vsel %vm1078, %v1045, 0
        %1081 = vmatprep.subr.bf16.mxu0 0
        %1082 = vmatpush1.bf16.msra.mxu0 %v1070
        %1083 = vmatprep.subr.bf16.mxu0 0
        %1084 = vmatpush1.bf16.msra.mxu0 %v1071
        %1085 = vmatprep.subr.bf16.mxu0 0
        %1086 = vmatpush1.bf16.msra.mxu0 %v1072
        %1087 = vmatprep.subr.bf16.mxu0 0
        %1088 = vmatpush1.bf16.msra.mxu0 %v1073
        %1089 = vmatprep.subr.bf16.mxu0 0
        %1090 = vmatpush1.bf16.msra.mxu0 0
        %1091 = vmatprep.subr.bf16.mxu0 0
        %1092 = vmatpush1.bf16.msra.mxu0 0
        %1093 = vmatprep.subr.bf16.mxu0 0
        %1094 = vmatpush1.bf16.msra.mxu0 0
        %1095 = vmatprep.subr.bf16.mxu0 0
        %1096 = vmatpush1.bf16.msra.mxu0 0
        %1097 = vmatprep.subr.bf16.mxu0 0
        %1098 = vmatpush1.bf16.msra.mxu0 0
        %1099 = vmatprep.subr.bf16.mxu0 0
        %1100 = vmatpush1.bf16.msra.mxu0 0
        %1101 = vmatprep.subr.bf16.mxu0 0
        %1102 = vmatpush1.bf16.msra.mxu0 0
        %1103 = vmatprep.subr.bf16.mxu0 0
        %1104 = vmatpush1.bf16.msra.mxu0 0
        %1105 = vmatprep.subr.bf16.mxu0 0
        %1106 = vmatpush1.bf16.msra.mxu0 0
        %1107 = vmatprep.subr.bf16.mxu0 0
        %1108 = vmatpush1.bf16.msra.mxu0 0
        %1109 = vmatprep.subr.bf16.mxu0 0
        %1110 = vmatpush1.bf16.msra.mxu0 0
        %1111 = vmatprep.subr.bf16.mxu0 0
        %1112 = vmatpush1.bf16.msra.mxu0 0
        %1113 = vmatprep.mubr.bf16.mxu0 0
        %1114 = vmatmul.mubr.bf16.gmra.mrb[0].mxu0 %v1079
        %v1115 = vpop.f32.mrb[0].mxu0
        %v1116 = vadd.f32 0.0, %v1115
        %v1117 = vpop.f32.mrb[0].mxu0
        %v1118 = vpop.f32.mrb[0].mxu0
        %v1119 = vpop.f32.mrb[0].mxu0
        %1120 = vdwg.mxu0
        %1121 = vst.msk [vmem:[%s376] sm:$0xff] %vm381, %v1116
        %s1122 = sand.u32 %s187, 1
        %s1123 = scalar_lea.sflag [#allocation4], %s1122
        %s1124 = sand.u32 %s187, 1
        %s1125 = smul.addr %s1124, 8
        %s1126 = scalar_lea.vmem [#allocation14], %s1125
        // Predicated region
        $region77: #{tpu_custom_call.1} parent=47 // pred_check
          %p1127 = pneg %p197
        $region78: #{tpu_custom_call.1} parent=47 // pred_check_branch
          %1129 = sbr.rel (%p1127) target = $region80
        $region79: #{tpu_custom_call.1} parent=47 // pred_region
          %s1131 = ssub.s32 128, 128
          %1132 = vsyncadd %s1123, %s1131
          %s1133 = smul.addr %s27, 128
          %s1134 = scalar_lea.hbm %s7, %s1133
          %s1136 = sshll.u32 %s1126, 4
          %s1137 = int_to_ptr.vmem [resolvable:$true] %s1136
          %1139 = dma.vmem_to_hbm [thread:$0]  %s1137, 128, %s1134, %s1123
        $region80: #{tpu_custom_call.1} parent=47 // pred_fallthru
          _
      $region48: #{tpu_custom_call.1} parent=5 // pred_fallthru
        _
      %p1140 = scmp.le.s32.totalorder 2, %s22
      // Predicated region
      $region81: #{tpu_custom_call.1} parent=5 // pred_check
        %p1141 = pneg %p1140
      $region82: #{tpu_custom_call.1} parent=5 // pred_check_branch
        %1143 = sbr.rel (%p1141) target = $region84
      $region83: #{tpu_custom_call.1} parent=5 // pred_region
        %s1144 = ssub.s32 %s22, 2
        // Predicated region
        $region85: #{tpu_custom_call.1} parent=83 // pred_check
          %p1145 = pneg %p203
        $region86: #{tpu_custom_call.1} parent=83 // pred_check_branch
          %1147 = sbr.rel (%p1145) target = $region88
        $region87: #{tpu_custom_call.1} parent=83 // pred_region
          %s1148 = sand.u32 %s188, 1
          %s1149 = scalar_lea.sflag [#allocation4], %s1148
          %s1150 = sand.u32 %s188, 1
          %s1151 = smul.addr %s1150, 8
          %s1152 = scalar_lea.vmem [#allocation14], %s1151
          %1153 = dma.done %s1149, 128
        $region88: #{tpu_custom_call.1} parent=83 // pred_fallthru
          _
      $region84: #{tpu_custom_call.1} parent=5 // pred_fallthru
        _
    $region6: #{tpu_custom_call.1} parent=1 // loop_footer
      %s26 = sadd.s32 1, %s22
    $region7: #{tpu_custom_call.1} parent=1 // loop_footer_branch
      %21 = sbr.rel target = $region3
    $region8: #{tpu_custom_call.1} parent=1 // loop_exit
      _
    %1154 = vsyncpa [#allocation3], 1
    %s1155 = scalar_lea.sflag [#allocation3], 1
    %1156 = vsyncpa %s1155, 1
    %1157 = vsyncpa [#allocation6], 1
    %1158 = vsyncpa [#allocation9], 1
    %1159 = vsyncpa [#allocation12], 1
    %1160 = vsyncpa [#allocation4], 1
    %s1161 = scalar_lea.sflag [#allocation4], 1
    %1162 = vsyncpa %s1161, 1

</llo_original>
